<compile_context>
chip_gen: v5e
topology: v5e:2x2
jax: 0.10.0
libtpu: 0.0.40
codegen_flags: <defaults>
</compile_context>

<pallas_src>
import math

import jax
import jax.numpy as jnp
from jax.experimental import pallas as pl
from jax.experimental.pallas import tpu as pltpu

LANE = 128
SUBLANE = 8


def _round_up(x, m):
    return (x + m - 1) // m * m


def _make_kernel(n):
    """kernel(comb_ref, x0_ref, ..., x{n-1}_ref, o_ref)."""

    def kernel(comb_ref, *refs):
        x_refs = refs[:n]
        o_ref = refs[n]
        # Accumulate in f32 regardless of input dtype (exact for f32 inputs,
        # avoids bf16 VALU accumulation / weight quantization otherwise).
        acc = x_refs[0][...].astype(jnp.float32) * comb_ref[0]
        for i in range(1, n):
            acc = acc + x_refs[i][...].astype(jnp.float32) * comb_ref[i]
        o_ref[...] = acc.astype(o_ref.dtype)

    return kernel


def convex_combination(comb, args, *,
                       target_block_bytes=1 << 20,   # ~1 MiB per input block
                       vmem_budget_bytes=24 << 20):  # safe on v5e/v6e/v7x
    """Pallas implementation of ConvexCombination.forward(*args)."""
    n = len(args)
    assert comb.shape == (n,)
    shape = args[0].shape
    dtype = args[0].dtype
    total = math.prod(shape)
    itemsize = jnp.dtype(dtype).itemsize

    # Lane-dense (rows, 128) view of each input.  The reshape is free when
    # total % 128 == 0; otherwise a small tail pad is needed.
    rows = pl.cdiv(total, LANE)
    padded = rows * LANE

    slabs = []
    for a in args:
        flat = a.reshape(-1)
        if padded != total:
            # TODO(synk): ragged tail — this pad costs one extra pass over the
            # input; a masked final tile would avoid it.
            flat = jnp.pad(flat, (0, padded - total))
        slabs.append(flat.reshape(rows, LANE))

    # --- Row-tile selection -------------------------------------------------
    # ~1 MiB per input block, capped so (2n inputs double-buffered + 2 output
    # buffers) stays inside a conservative VMEM budget (v7x has only 64 MiB
    # physical / 32 MiB default scoped VMEM).
    tm = max(SUBLANE, (target_block_bytes // (LANE * itemsize)) // SUBLANE * SUBLANE)
    tm_cap = max(
        SUBLANE,
        (vmem_budget_bytes // ((2 * n + 2) * LANE * itemsize)) // SUBLANE * SUBLANE,
    )
    tm = min(tm, tm_cap)

    if rows <= tm:
        if rows >= 4 * SUBLANE:
            # Keep >= 2 parallel row tiles so both v7x TensorCores get work.
            tm = _round_up(pl.cdiv(rows, 2), SUBLANE)
        else:
            # Tiny input: single full-extent block (always a legal block shape).
            tm = rows
    grid = (pl.cdiv(rows, tm),)

    # comb stays float32 (SMEM scalar prefetch) — no weight quantization.
    comb_f32 = comb.astype(jnp.float32)

    cost = pl.CostEstimate(
        flops=2 * n * total,
        transcendentals=0,
        bytes_accessed=(n + 1) * total * itemsize,
    )

    tile_spec = lambda: pl.BlockSpec((tm, LANE), lambda r, comb_ref: (r, 0))

    out2d = pl.pallas_call(
        _make_kernel(n),
        out_shape=jax.ShapeDtypeStruct((rows, LANE), dtype),
        grid_spec=pltpu.PrefetchScalarGridSpec(
            num_scalar_prefetch=1,          # comb -> SMEM
            grid=grid,
            in_specs=[tile_spec() for _ in range(n)],
            out_specs=tile_spec(),
        ),
        compiler_params=pltpu.CompilerParams(
            dimension_semantics=("parallel",),
        ),
        cost_estimate=cost,
    )(comb_f32, *slabs)

    out_flat = out2d.reshape(-1)
    if padded != total:
        out_flat = out_flat[:total]
    return out_flat.reshape(shape)


if __name__ == "__main__":
    n = 3
    x_shape = (2, 4, 16, 16)  # NCHW, small

    # Deterministic parameter init, exactly as in __init__: ones(n) / n.
    comb = jnp.ones((n,), dtype=jnp.float32) / n

    key = jax.random.PRNGKey(0)
    keys = jax.random.split(key, n)
    args = [jax.random.normal(k, x_shape, dtype=jnp.float32) for k in keys]

    out = convex_combination(comb, args)
    out = jax.block_until_ready(out)

    # Reference (plain JAX, mirrors the PyTorch forward exactly).
    ref = 0
    for i in range(n):
        ref = ref + args[i] * comb[i]

    assert out.shape == ref.shape and out.dtype == ref.dtype
    assert jnp.allclose(out, ref, atol=1e-6, rtol=1e-6)
    print("KERNEL_OK")
</pallas_src>

<mosaic_0001>
module attributes {stable_mosaic.version = 11 : i64} {
  func.func @kernel(%arg0: i32, %arg1: memref<3xf32, #tpu.memory_space<smem>>, %arg2: memref<16x128xf32, #tpu.memory_space<vmem>>, %arg3: memref<16x128xf32, #tpu.memory_space<vmem>>, %arg4: memref<16x128xf32, #tpu.memory_space<vmem>>, %arg5: memref<16x128xf32, #tpu.memory_space<vmem>>) attributes {dimension_semantics = [#tpu.dimension_semantics<parallel>], iteration_bounds = array<i64: 1>, scalar_prefetch = 1 : i64, scratch_operands = 0 : i64, tpu.core_type = #tpu.core_type<tc>, window_params = [{transform_indices = @transform_0, window_bounds = array<i64: 16, 128>}, {transform_indices = @transform_1, window_bounds = array<i64: 16, 128>}, {transform_indices = @transform_2, window_bounds = array<i64: 16, 128>}, {transform_indices = @transform_3, window_bounds = array<i64: 16, 128>}]} {
    %c0 = arith.constant 0 : index
    %c0_0 = arith.constant 0 : index
    %0 = vector.load %arg2[%c0, %c0_0] : memref<16x128xf32, #tpu.memory_space<vmem>>, vector<16x128xf32>
    %c0_1 = arith.constant 0 : index
    %1 = memref.load %arg1[%c0_1] : memref<3xf32, #tpu.memory_space<smem>>
    %2 = vector.broadcast %1 : f32 to vector<16x128xf32>
    %3 = arith.mulf %0, %2 : vector<16x128xf32>
    %c0_2 = arith.constant 0 : index
    %c0_3 = arith.constant 0 : index
    %4 = vector.load %arg3[%c0_2, %c0_3] : memref<16x128xf32, #tpu.memory_space<vmem>>, vector<16x128xf32>
    %c1 = arith.constant 1 : index
    %5 = memref.load %arg1[%c1] : memref<3xf32, #tpu.memory_space<smem>>
    %6 = vector.broadcast %5 : f32 to vector<16x128xf32>
    %7 = arith.mulf %4, %6 : vector<16x128xf32>
    %8 = arith.addf %3, %7 : vector<16x128xf32>
    %c0_4 = arith.constant 0 : index
    %c0_5 = arith.constant 0 : index
    %9 = vector.load %arg4[%c0_4, %c0_5] : memref<16x128xf32, #tpu.memory_space<vmem>>, vector<16x128xf32>
    %c2 = arith.constant 2 : index
    %10 = memref.load %arg1[%c2] : memref<3xf32, #tpu.memory_space<smem>>
    %11 = vector.broadcast %10 : f32 to vector<16x128xf32>
    %12 = arith.mulf %9, %11 : vector<16x128xf32>
    %13 = arith.addf %8, %12 : vector<16x128xf32>
    %c0_6 = arith.constant 0 : index
    %c0_7 = arith.constant 0 : index
    %14 = vector.load %arg5[%c0_6, %c0_7] : memref<16x128xf32, #tpu.memory_space<vmem>>, vector<16x128xf32>
    tpu.vector_store %arg5[%c0_6, %c0_7], %13 {strides = array<i32>} : memref<16x128xf32, #tpu.memory_space<vmem>>, vector<16x128xf32>,
    return
  }
  func.func @transform_0(%arg0: i32, %arg1: memref<3xf32, #tpu.memory_space<smem>>) -> (i32, i32) {
    %c0_i32 = arith.constant 0 : i32
    %c0_i32_0 = arith.constant 0 : i32
    return %arg0, %c0_i32 : i32, i32
  }
  func.func @transform_1(%arg0: i32, %arg1: memref<3xf32, #tpu.memory_space<smem>>) -> (i32, i32) {
    %c0_i32 = arith.constant 0 : i32
    %c0_i32_0 = arith.constant 0 : i32
    return %arg0, %c0_i32 : i32, i32
  }
  func.func @transform_2(%arg0: i32, %arg1: memref<3xf32, #tpu.memory_space<smem>>) -> (i32, i32) {
    %c0_i32 = arith.constant 0 : i32
    %c0_i32_0 = arith.constant 0 : i32
    return %arg0, %c0_i32 : i32, i32
  }
  func.func @transform_3(%arg0: i32, %arg1: memref<3xf32, #tpu.memory_space<smem>>) -> (i32, i32) {
    %c0_i32 = arith.constant 0 : i32
    %c0_i32_0 = arith.constant 0 : i32
    return %arg0, %c0_i32 : i32, i32
  }
}

</mosaic_0001>

<llo_original>
// kernel: tpu_custom_call.1
$region0: #{tpu_custom_call.1}
  #allocation0 [shape = 'u32[]', space=smem, size = 0x4, offset = 0x4, fixed_abs, tag = 'smem constant byte address 0x4 - core index']
  #allocation1 [shape = 'u32[72,128]{1,0:T(1,128)}', space=vmem, size = 0x9000, scoped, tag = 'internal scratch']
  #allocation2 [shape = 's32[1]{0}', space=sflag, size = 0x4, scoped, tag = 'scoped memory for tpu_custom_call.1']
  #allocation3 [shape = 'u8[512]{0}', space=smem, size = 0x200, scoped, tag = 'prefetched SMEM operand 0']
  %s0 = inlined_call_operand.hbm [shape: f32[3], index: 0, kind: input, shape index: {}]
  %s1 = inlined_call_operand.hbm [shape: f32[16,128], index: 1, kind: input, shape index: {}]
  %s2 = inlined_call_operand.hbm [shape: f32[16,128], index: 2, kind: input, shape index: {}]
  %s3 = inlined_call_operand.hbm [shape: f32[16,128], index: 3, kind: input, shape index: {}]
  %s4 = inlined_call_operand.hbm [shape: f32[16,128], index: 4, kind: output, shape index: {}]
  %s5 = sld [smem:[#allocation0]]
  $region34: #{tpu_custom_call.1} parent=0
    _
  %s7 = ssub.s32 1, %s5
  %s8 = scalar_select 0, %s7, %s5
  %s10 = sshll.u32 %s0, 4
  %s11 = int_to_ptr.hbm [resolvable:$true] %s10
  %13 = dma.hbm_to_smem %s11, 16, [#allocation3], [#allocation2]
  %15 = dma.done [#allocation2], 16
  %16 = sfence
  $region1: #{tpu_custom_call.1} parent=0
    #allocation4 [shape = 'u8[8192]{0}', space=vmem, size = 0x2000, scoped, tag = 'input window, operand 1, single buffered']
    #allocation5 [shape = 's32[1]{0}', space=sflag, size = 0x4, scoped, tag = 'scoped memory for tpu_custom_call.1']
    #allocation6 [shape = 's32[1]{0}', space=sflag, size = 0x4, scoped, tag = 'scoped memory for tpu_custom_call.1']
    #allocation7 [shape = 'u8[8192]{0}', space=vmem, size = 0x2000, scoped, tag = 'input window, operand 2, single buffered']
    #allocation8 [shape = 's32[1]{0}', space=sflag, size = 0x4, scoped, tag = 'scoped memory for tpu_custom_call.1']
    #allocation9 [shape = 'u8[8192]{0}', space=vmem, size = 0x2000, scoped, tag = 'input window, operand 3, single buffered']
    #allocation10 [shape = 'u8[8192]{0}', space=vmem, size = 0x2000, scoped, tag = 'output window, operand 0, single buffered']
    %17 = vsyncpa [#allocation5], 0
    %18 = vsyncpa [#allocation8], 0
    %19 = vsyncpa [#allocation6], 0
    // Predicated region
    $region2: #{tpu_custom_call.1} parent=1 // pred_check
      _
    $region3: #{tpu_custom_call.1} parent=1 // pred_check_branch
      %21 = sbr.rel (0) target = $region5
    $region4: #{tpu_custom_call.1} parent=1 // pred_region
      %23 = vsyncadd [#allocation5], 0
      %s24 = sshll.u32 %s1, 4
      %s25 = int_to_ptr.hbm [resolvable:$true] %s24
      %s26 = sshll.u32 [#allocation4], 4
      %s27 = int_to_ptr.vmem [resolvable:$true] %s26
      %32 = dma.hbm_to_vmem [thread:$0]  %s25, 256, %s27, [#allocation5], 128, 128, 8
    $region5: #{tpu_custom_call.1} parent=1 // pred_fallthru
      _
    // Predicated region
    $region6: #{tpu_custom_call.1} parent=1 // pred_check
      _
    $region7: #{tpu_custom_call.1} parent=1 // pred_check_branch
      %34 = sbr.rel (0) target = $region9
    $region8: #{tpu_custom_call.1} parent=1 // pred_region
      %36 = vsyncadd [#allocation8], 0
      %s37 = sshll.u32 %s2, 4
      %s38 = int_to_ptr.hbm [resolvable:$true] %s37
      %s39 = sshll.u32 [#allocation7], 4
      %s40 = int_to_ptr.vmem [resolvable:$true] %s39
      %45 = dma.hbm_to_vmem [thread:$0]  %s38, 256, %s40, [#allocation8], 128, 128, 8
    $region9: #{tpu_custom_call.1} parent=1 // pred_fallthru
      _
    // Predicated region
    $region10: #{tpu_custom_call.1} parent=1 // pred_check
      _
    $region11: #{tpu_custom_call.1} parent=1 // pred_check_branch
      %47 = sbr.rel (0) target = $region13
    $region12: #{tpu_custom_call.1} parent=1 // pred_region
      %49 = vsyncadd [#allocation8], 0
      %s50 = sshll.u32 %s3, 4
      %s51 = int_to_ptr.hbm [resolvable:$true] %s50
      %s52 = sshll.u32 [#allocation9], 4
      %s53 = int_to_ptr.vmem [resolvable:$true] %s52
      %58 = dma.hbm_to_vmem [thread:$0]  %s51, 256, %s53, [#allocation8], 128, 128, 8
    $region13: #{tpu_custom_call.1} parent=1 // pred_fallthru
      _
    // Predicated region
    $region14: #{tpu_custom_call.1} parent=1 // pred_check
      _
    $region15: #{tpu_custom_call.1} parent=1 // pred_check_branch
      %60 = sbr.rel (0) target = $region17
    $region16: #{tpu_custom_call.1} parent=1 // pred_region
      %62 = dma.done [#allocation5], 256
    $region17: #{tpu_custom_call.1} parent=1 // pred_fallthru
      _
    // Predicated region
    $region18: #{tpu_custom_call.1} parent=1 // pred_check
      _
    $region19: #{tpu_custom_call.1} parent=1 // pred_check_branch
      %64 = sbr.rel (0) target = $region21
    $region20: #{tpu_custom_call.1} parent=1 // pred_region
      %66 = dma.done [#allocation8], 256
    $region21: #{tpu_custom_call.1} parent=1 // pred_fallthru
      _
    // Predicated region
    $region22: #{tpu_custom_call.1} parent=1 // pred_check
      _
    $region23: #{tpu_custom_call.1} parent=1 // pred_check_branch
      %68 = sbr.rel (0) target = $region25
    $region24: #{tpu_custom_call.1} parent=1 // pred_region
      %70 = dma.done [#allocation8], 256
    $region25: #{tpu_custom_call.1} parent=1 // pred_fallthru
      _
    %v71 = vld [vmem:[#allocation4] sm:$0xff]
    %v72 = vld [vmem:[#allocation4 + $0x8] sm:$0xff]
    %s73 = sld [smem:[#allocation3]]
    %v74 = vstv %s73
    %v75 = vmul.f32 %v71, %v74
    %v76 = vmul.f32 %v72, %v74
    %v77 = vld [vmem:[#allocation7] sm:$0xff]
    %v78 = vld [vmem:[#allocation7 + $0x8] sm:$0xff]
    %s79 = sld [smem:[#allocation3 + $0x1]]
    %v80 = vstv %s79
    %v81 = vmul.f32 %v77, %v80
    %v82 = vmul.f32 %v78, %v80
    %v83 = vadd.f32 %v75, %v81
    %v84 = vadd.f32 %v76, %v82
    %v85 = vld [vmem:[#allocation9] sm:$0xff]
    %v86 = vld [vmem:[#allocation9 + $0x8] sm:$0xff]
    %s87 = sld [smem:[#allocation3 + $0x2]]
    %v88 = vstv %s87
    %v89 = vmul.f32 %v85, %v88
    %v90 = vmul.f32 %v86, %v88
    %v91 = vadd.f32 %v83, %v89
    %v92 = vadd.f32 %v84, %v90
    %93 = vst [vmem:[#allocation10] sm:$0xff] %v91
    %94 = vst [vmem:[#allocation10 + $0x8] sm:$0xff] %v92
    // Predicated region
    $region26: #{tpu_custom_call.1} parent=1 // pred_check
      _
    $region27: #{tpu_custom_call.1} parent=1 // pred_check_branch
      %96 = sbr.rel (0) target = $region29
    $region28: #{tpu_custom_call.1} parent=1 // pred_region
      %98 = vsyncadd [#allocation6], 0
      %s99 = sshll.u32 [#allocation10], 4
      %s100 = int_to_ptr.vmem [resolvable:$true] %s99
      %s101 = sshll.u32 %s4, 4
      %s102 = int_to_ptr.hbm [resolvable:$true] %s101
      %107 = dma.vmem_to_hbm [thread:$0]  %s100, 256, %s102, [#allocation6], 128, 128, 8
    $region29: #{tpu_custom_call.1} parent=1 // pred_fallthru
      _
    // Predicated region
    $region30: #{tpu_custom_call.1} parent=1 // pred_check
      _
    $region31: #{tpu_custom_call.1} parent=1 // pred_check_branch
      %109 = sbr.rel (0) target = $region33
    $region32: #{tpu_custom_call.1} parent=1 // pred_region
      %111 = dma.done [#allocation6], 256
    $region33: #{tpu_custom_call.1} parent=1 // pred_fallthru
      _
    %112 = vsyncpa [#allocation5], 1
    %113 = vsyncpa [#allocation8], 1
    %114 = vsyncpa [#allocation6], 1

</llo_original>
